<compile_context>
chip_gen: v5e
topology: v5e:2x2
jax: 0.10.0
libtpu: 0.0.40
codegen_flags: <defaults>
</compile_context>

<pallas_src>
import numpy as np
import jax
import jax.numpy as jnp
from jax.experimental import pallas as pl
from jax.experimental.pallas import tpu as pltpu

LN_EPS = 1e-5  # torch.nn.LayerNorm default


def _layer_norm(h, gamma, beta):
    mu = jnp.mean(h, axis=-1, keepdims=True)
    var = jnp.mean((h - mu) ** 2, axis=-1, keepdims=True)
    return (h - mu) * jax.lax.rsqrt(var + LN_EPS) * gamma + beta


def dueling_kernel(
    x_ref,        # (TILE_B, H)
    w1_ref,       # (H, 2H)   fused [Wv1 | Wa1]
    b1_ref,       # (1, 2H)   fused [bv1 | ba1]
    g_ref,        # (1, 2H)   fused LN gamma
    beta_ref,     # (1, 2H)   fused LN beta
    wv2_ref,      # (1, H)    value head weight as a row (wv2.T)
    bv2_ref,      # (1, 1)
    wa2_ref,      # (H, A)
    ba2_ref,      # (1, A)
    out_ref,      # (TILE_B, A)
):
    H = w1_ref.shape[0]
    x = x_ref[...]

    # ---- fused first layer: one MXU pass covers both streams ----
    h = jnp.dot(x, w1_ref[...], preferred_element_type=jnp.float32) + b1_ref[...]

    # ---- per-stream LayerNorm + ReLU (stats over each H half separately) ----
    hv = jnp.maximum(_layer_norm(h[:, :H], g_ref[:, :H], beta_ref[:, :H]), 0.0)
    ha = jnp.maximum(_layer_norm(h[:, H:], g_ref[:, H:], beta_ref[:, H:]), 0.0)

    # ---- value head: N=1 output -> VPU mul + XLU lane reduction (no degenerate MXU pass)
    vals = jnp.sum(hv * wv2_ref[...], axis=-1, keepdims=True) + bv2_ref[...]   # (TILE_B, 1)

    # ---- advantage head (MXU) ----
    advs = jnp.dot(ha, wa2_ref[...], preferred_element_type=jnp.float32) + ba2_ref[...]  # (TILE_B, A)

    # ---- dueling combination (mean over actions = XLU reduce, effectively free) ----
    out_ref[...] = vals + advs - jnp.mean(advs, axis=-1, keepdims=True)


def pack_params(p):
    """Host-side one-time packing of the per-stream weights into fused layouts."""
    return dict(
        w1=jnp.concatenate([p["wv1"], p["wa1"]], axis=1),        # (H, 2H)
        b1=jnp.concatenate([p["bv1"], p["ba1"]], axis=1),        # (1, 2H)
        g=jnp.concatenate([p["gv"], p["ga"]], axis=1),           # (1, 2H)
        beta=jnp.concatenate([p["betav"], p["betaa"]], axis=1),  # (1, 2H)
        wv2_row=p["wv2"].T,                                      # (1, H)
        bv2=p["bv2"],                                            # (1, 1)
        wa2=p["wa2"],                                            # (H, A)
        ba2=p["ba2"],                                            # (1, A)
    )


def dueling_forward(x, packed, *, tile_b=512):
    """x: (B, H) fp32. packed: output of pack_params(). Returns (B, A) fp32."""
    B, H = x.shape
    A = packed["wa2"].shape[1]

    # Batch tiling. Either a single tile covering the whole (possibly ragged)
    # batch, or sublane-aligned (multiple-of-8) tiles -> unmasked vector stores.
    if B <= tile_b:
        tile_b = B
        n_tiles, b_pad = 1, B
    else:
        tile_b = max(8, (tile_b // 8) * 8)
        n_tiles = pl.cdiv(B, tile_b)
        b_pad = n_tiles * tile_b
    if b_pad != B:
        # zero rows: LN stays finite (var=0 -> rsqrt(eps)), padded rows sliced off.
        x = jnp.pad(x, ((0, b_pad - B), (0, 0)))

    def const_spec(shape):
        # Weights / biases: same block every grid step -> stay VMEM-resident.
        return pl.BlockSpec(shape, lambda i: (0, 0))

    grid_spec = pltpu.PrefetchScalarGridSpec(
        num_scalar_prefetch=0,
        grid=(n_tiles,),
        in_specs=[
            pl.BlockSpec((tile_b, H), lambda i: (i, 0)),   # x tile (pipelined)
            const_spec((H, 2 * H)),                        # w1
            const_spec((1, 2 * H)),                        # b1
            const_spec((1, 2 * H)),                        # gamma
            const_spec((1, 2 * H)),                        # beta
            const_spec((1, H)),                            # wv2 row
            const_spec((1, 1)),                            # bv2
            const_spec((H, A)),                            # wa2
            const_spec((1, A)),                            # ba2
        ],
        out_specs=pl.BlockSpec((tile_b, A), lambda i: (i, 0)),
    )

    itemsize = 4  # fp32
    weight_bytes = sum(int(v.size) for v in packed.values()) * itemsize

    # Explicit VMEM budget (keeps us honest on v7x's 64 MiB physical VMEM):
    # double-buffered weights + double-buffered x/out tiles + intermediates headroom.
    tile_bytes = (tile_b * H + tile_b * A) * itemsize              # one x tile + one out tile
    interm_bytes = (tile_b * 2 * H) * itemsize                     # fused hidden (and slices)
    vmem_budget = 2 * weight_bytes + 2 * tile_bytes + 4 * interm_bytes + (8 << 20)
    vmem_limit = int(min(max(vmem_budget, 16 << 20), 48 << 20))

    # Advisory cost hint for the XLA scheduler around the custom call.
    flops = 2 * b_pad * H * (2 * H) + 2 * b_pad * H * A + 2 * b_pad * H
    cost = pl.CostEstimate(
        flops=flops,
        transcendentals=2 * b_pad,                                  # one rsqrt per row per stream
        bytes_accessed=(b_pad * (H + A)) * itemsize + weight_bytes,
    )

    out = pl.pallas_call(
        dueling_kernel,
        out_shape=jax.ShapeDtypeStruct((b_pad, A), jnp.float32),
        grid_spec=grid_spec,
        compiler_params=pltpu.CompilerParams(
            dimension_semantics=("parallel",),   # independent batch tiles -> megacore-shardable
            vmem_limit_bytes=vmem_limit,
        ),
        cost_estimate=cost,
    )(
        x,
        packed["w1"], packed["b1"], packed["g"], packed["beta"],
        packed["wv2_row"], packed["bv2"], packed["wa2"], packed["ba2"],
    )
    return out[:B]


def init_params(key, hidden_size, n_actions):
    """Deterministic init mimicking PyTorch nn.Linear defaults (uniform +- 1/sqrt(fan_in)).

    Weights are stored transposed to (in, out); biases / LN params as (1, dim).
    """
    H, A = hidden_size, n_actions
    ks = jax.random.split(key, 8)
    bound = 1.0 / np.sqrt(H)

    def u(k, shape):
        return jax.random.uniform(k, shape, jnp.float32, -bound, bound)

    return dict(
        # value stream
        wv1=u(ks[0], (H, H)), bv1=u(ks[1], (1, H)),
        gv=jnp.ones((1, H), jnp.float32), betav=jnp.zeros((1, H), jnp.float32),
        wv2=u(ks[2], (H, 1)), bv2=u(ks[3], (1, 1)),
        # advantage stream
        wa1=u(ks[4], (H, H)), ba1=u(ks[5], (1, H)),
        ga=jnp.ones((1, H), jnp.float32), betaa=jnp.zeros((1, H), jnp.float32),
        wa2=u(ks[6], (H, A)), ba2=u(ks[7], (1, A)),
    )


def dueling_reference(x, p):
    """Plain-JAX reference mirroring the PyTorch module."""
    def stream(w1, b1, g, beta, w2, b2):
        h = x @ w1 + b1
        mu = h.mean(-1, keepdims=True)
        var = ((h - mu) ** 2).mean(-1, keepdims=True)
        h = (h - mu) / jnp.sqrt(var + LN_EPS) * g + beta
        h = jnp.maximum(h, 0.0)
        return h @ w2 + b2

    vals = stream(p["wv1"], p["bv1"], p["gv"], p["betav"], p["wv2"], p["bv2"])
    advs = stream(p["wa1"], p["ba1"], p["ga"], p["betaa"], p["wa2"], p["ba2"])
    return vals + advs - advs.mean(-1, keepdims=True)


if __name__ == "__main__":
    B, H, A = 20, 32, 8  # batch, hidden_size, n_actions (small; exercises grid + batch padding)

    key = jax.random.PRNGKey(0)
    kx, kp = jax.random.split(key)
    x = jax.random.normal(kx, (B, H), jnp.float32)
    params = init_params(kp, H, A)
    packed = pack_params(params)

    # tile_b=8 so the toy batch spans multiple grid steps (20 -> 3 tiles of 8, padded).
    out = jax.block_until_ready(dueling_forward(x, packed, tile_b=8))
    ref = dueling_reference(x, params)

    assert out.shape == (B, A), out.shape
    np.testing.assert_allclose(np.asarray(out), np.asarray(ref), rtol=1e-5, atol=1e-5)
    print("KERNEL_OK")
</pallas_src>

<mosaic_0001>
module attributes {stable_mosaic.version = 11 : i64} {
  func.func @dueling_kernel(%arg0: i32, %arg1: memref<8x32xf32, #tpu.memory_space<vmem>>, %arg2: memref<32x64xf32, #tpu.memory_space<vmem>>, %arg3: memref<1x64xf32, #tpu.memory_space<vmem>>, %arg4: memref<1x64xf32, #tpu.memory_space<vmem>>, %arg5: memref<1x64xf32, #tpu.memory_space<vmem>>, %arg6: memref<1x32xf32, #tpu.memory_space<vmem>>, %arg7: memref<1x1xf32, #tpu.memory_space<vmem>>, %arg8: memref<32x8xf32, #tpu.memory_space<vmem>>, %arg9: memref<1x8xf32, #tpu.memory_space<vmem>>, %arg10: memref<8x8xf32, #tpu.memory_space<vmem>>) attributes {dimension_semantics = [#tpu.dimension_semantics<parallel>], iteration_bounds = array<i64: 3>, scalar_prefetch = 0 : i64, scratch_operands = 0 : i64, tpu.core_type = #tpu.core_type<tc>, window_params = [{transform_indices = @transform_0, window_bounds = array<i64: 8, 32>}, {pipeline_mode = #tpu.pipeline_mode<synchronous>, transform_indices = @transform_1, window_bounds = array<i64: 32, 64>}, {pipeline_mode = #tpu.pipeline_mode<synchronous>, transform_indices = @transform_2, window_bounds = array<i64: 1, 64>}, {pipeline_mode = #tpu.pipeline_mode<synchronous>, transform_indices = @transform_3, window_bounds = array<i64: 1, 64>}, {pipeline_mode = #tpu.pipeline_mode<synchronous>, transform_indices = @transform_4, window_bounds = array<i64: 1, 64>}, {pipeline_mode = #tpu.pipeline_mode<synchronous>, transform_indices = @transform_5, window_bounds = array<i64: 1, 32>}, {pipeline_mode = #tpu.pipeline_mode<synchronous>, transform_indices = @transform_6, window_bounds = array<i64: 1, 1>}, {pipeline_mode = #tpu.pipeline_mode<synchronous>, transform_indices = @transform_7, window_bounds = array<i64: 32, 8>}, {pipeline_mode = #tpu.pipeline_mode<synchronous>, transform_indices = @transform_8, window_bounds = array<i64: 1, 8>}, {transform_indices = @transform_9, window_bounds = array<i64: 8, 8>}]} {
    %c0 = arith.constant 0 : index
    %c0_0 = arith.constant 0 : index
    %0 = vector.load %arg1[%c0, %c0_0] : memref<8x32xf32, #tpu.memory_space<vmem>>, vector<8x32xf32>
    %c0_1 = arith.constant 0 : index
    %c0_2 = arith.constant 0 : index
    %1 = vector.load %arg2[%c0_1, %c0_2] : memref<32x64xf32, #tpu.memory_space<vmem>>, vector<32x64xf32>
    %cst = arith.constant dense<0.000000e+00> : vector<8x64xf32>
    %2 = tpu.matmul %0, %1, %cst {dimension_numbers = #tpu.dot_dimension_numbers<[1], [0], [0], [1], [0, 0, 1, 1], [], []>} : vector<8x32xf32>, vector<32x64xf32>, vector<8x64xf32> -> vector<8x64xf32>
    %c0_3 = arith.constant 0 : index
    %c0_4 = arith.constant 0 : index
    %3 = vector.load %arg3[%c0_3, %c0_4] : memref<1x64xf32, #tpu.memory_space<vmem>>, vector<1x64xf32>
    %4 = vector.broadcast %3 : vector<1x64xf32> to vector<8x64xf32>
    %5 = arith.addf %2, %4 : vector<8x64xf32>
    %6 = vector.extract_strided_slice %5 {offsets = [0, 0], sizes = [8, 32], strides = [1, 1]} : vector<8x64xf32> to vector<8x32xf32>
    %c0_5 = arith.constant 0 : index
    %c0_6 = arith.constant 0 : index
    %7 = vector.load %arg4[%c0_5, %c0_6] : memref<1x64xf32, #tpu.memory_space<vmem>>, vector<1x32xf32>
    %c0_7 = arith.constant 0 : index
    %c0_8 = arith.constant 0 : index
    %8 = vector.load %arg5[%c0_7, %c0_8] : memref<1x64xf32, #tpu.memory_space<vmem>>, vector<1x32xf32>
    %cst_9 = arith.constant dense<0.000000e+00> : vector<8xf32>
    %9 = vector.multi_reduction <add>, %6, %cst_9 [1] : vector<8x32xf32> to vector<8xf32>
    %10 = vector.shape_cast %9 : vector<8xf32> to vector<8x1xf32>
    %cst_10 = arith.constant 3.200000e+01 : f32
    %11 = vector.broadcast %cst_10 : f32 to vector<8x1xf32>
    %12 = arith.divf %10, %11 : vector<8x1xf32>
    %13 = vector.broadcast %12 : vector<8x1xf32> to vector<8x32xf32>
    %14 = arith.subf %6, %13 : vector<8x32xf32>
    %15 = arith.mulf %14, %14 : vector<8x32xf32>
    %cst_11 = arith.constant dense<0.000000e+00> : vector<8xf32>
    %16 = vector.multi_reduction <add>, %15, %cst_11 [1] : vector<8x32xf32> to vector<8xf32>
    %17 = vector.shape_cast %16 : vector<8xf32> to vector<8x1xf32>
    %cst_12 = arith.constant 3.200000e+01 : f32
    %18 = vector.broadcast %cst_12 : f32 to vector<8x1xf32>
    %19 = arith.divf %17, %18 : vector<8x1xf32>
    %20 = vector.broadcast %12 : vector<8x1xf32> to vector<8x32xf32>
    %21 = arith.subf %6, %20 : vector<8x32xf32>
    %cst_13 = arith.constant 9.99999974E-6 : f32
    %22 = vector.broadcast %cst_13 : f32 to vector<8x1xf32>
    %23 = arith.addf %19, %22 : vector<8x1xf32>
    %24 = math.rsqrt %23 : vector<8x1xf32>
    %25 = vector.broadcast %24 : vector<8x1xf32> to vector<8x32xf32>
    %26 = arith.mulf %21, %25 : vector<8x32xf32>
    %27 = vector.broadcast %7 : vector<1x32xf32> to vector<8x32xf32>
    %28 = arith.mulf %26, %27 : vector<8x32xf32>
    %29 = vector.broadcast %8 : vector<1x32xf32> to vector<8x32xf32>
    %30 = arith.addf %28, %29 : vector<8x32xf32>
    %cst_14 = arith.constant 0.000000e+00 : f32
    %31 = vector.broadcast %cst_14 : f32 to vector<8x32xf32>
    %32 = arith.maximumf %30, %31 : vector<8x32xf32>
    %33 = vector.extract_strided_slice %5 {offsets = [0, 32], sizes = [8, 32], strides = [1, 1]} : vector<8x64xf32> to vector<8x32xf32>
    %c0_15 = arith.constant 0 : index
    %c32 = arith.constant 32 : index
    %34 = vector.load %arg4[%c0_15, %c32] : memref<1x64xf32, #tpu.memory_space<vmem>>, vector<1x32xf32>
    %c0_16 = arith.constant 0 : index
    %c32_17 = arith.constant 32 : index
    %35 = vector.load %arg5[%c0_16, %c32_17] : memref<1x64xf32, #tpu.memory_space<vmem>>, vector<1x32xf32>
    %cst_18 = arith.constant dense<0.000000e+00> : vector<8xf32>
    %36 = vector.multi_reduction <add>, %33, %cst_18 [1] : vector<8x32xf32> to vector<8xf32>
    %37 = vector.shape_cast %36 : vector<8xf32> to vector<8x1xf32>
    %cst_19 = arith.constant 3.200000e+01 : f32
    %38 = vector.broadcast %cst_19 : f32 to vector<8x1xf32>
    %39 = arith.divf %37, %38 : vector<8x1xf32>
    %40 = vector.broadcast %39 : vector<8x1xf32> to vector<8x32xf32>
    %41 = arith.subf %33, %40 : vector<8x32xf32>
    %42 = arith.mulf %41, %41 : vector<8x32xf32>
    %cst_20 = arith.constant dense<0.000000e+00> : vector<8xf32>
    %43 = vector.multi_reduction <add>, %42, %cst_20 [1] : vector<8x32xf32> to vector<8xf32>
    %44 = vector.shape_cast %43 : vector<8xf32> to vector<8x1xf32>
    %cst_21 = arith.constant 3.200000e+01 : f32
    %45 = vector.broadcast %cst_21 : f32 to vector<8x1xf32>
    %46 = arith.divf %44, %45 : vector<8x1xf32>
    %47 = vector.broadcast %39 : vector<8x1xf32> to vector<8x32xf32>
    %48 = arith.subf %33, %47 : vector<8x32xf32>
    %cst_22 = arith.constant 9.99999974E-6 : f32
    %49 = vector.broadcast %cst_22 : f32 to vector<8x1xf32>
    %50 = arith.addf %46, %49 : vector<8x1xf32>
    %51 = math.rsqrt %50 : vector<8x1xf32>
    %52 = vector.broadcast %51 : vector<8x1xf32> to vector<8x32xf32>
    %53 = arith.mulf %48, %52 : vector<8x32xf32>
    %54 = vector.broadcast %34 : vector<1x32xf32> to vector<8x32xf32>
    %55 = arith.mulf %53, %54 : vector<8x32xf32>
    %56 = vector.broadcast %35 : vector<1x32xf32> to vector<8x32xf32>
    %57 = arith.addf %55, %56 : vector<8x32xf32>
    %cst_23 = arith.constant 0.000000e+00 : f32
    %58 = vector.broadcast %cst_23 : f32 to vector<8x32xf32>
    %59 = arith.maximumf %57, %58 : vector<8x32xf32>
    %c0_24 = arith.constant 0 : index
    %c0_25 = arith.constant 0 : index
    %60 = vector.load %arg6[%c0_24, %c0_25] : memref<1x32xf32, #tpu.memory_space<vmem>>, vector<1x32xf32>
    %61 = vector.broadcast %60 : vector<1x32xf32> to vector<8x32xf32>
    %62 = arith.mulf %32, %61 : vector<8x32xf32>
    %cst_26 = arith.constant dense<0.000000e+00> : vector<8xf32>
    %63 = vector.multi_reduction <add>, %62, %cst_26 [1] : vector<8x32xf32> to vector<8xf32>
    %64 = vector.shape_cast %63 : vector<8xf32> to vector<8x1xf32>
    %c0_27 = arith.constant 0 : index
    %c0_28 = arith.constant 0 : index
    %65 = vector.load %arg7[%c0_27, %c0_28] : memref<1x1xf32, #tpu.memory_space<vmem>>, vector<1x1xf32>
    %66 = vector.broadcast %65 : vector<1x1xf32> to vector<8x1xf32>
    %67 = arith.addf %64, %66 : vector<8x1xf32>
    %c0_29 = arith.constant 0 : index
    %c0_30 = arith.constant 0 : index
    %68 = vector.load %arg8[%c0_29, %c0_30] : memref<32x8xf32, #tpu.memory_space<vmem>>, vector<32x8xf32>
    %cst_31 = arith.constant dense<0.000000e+00> : vector<8x8xf32>
    %69 = tpu.matmul %59, %68, %cst_31 {dimension_numbers = #tpu.dot_dimension_numbers<[1], [0], [0], [1], [0, 0, 1, 1], [], []>} : vector<8x32xf32>, vector<32x8xf32>, vector<8x8xf32> -> vector<8x8xf32>
    %c0_32 = arith.constant 0 : index
    %c0_33 = arith.constant 0 : index
    %70 = vector.load %arg9[%c0_32, %c0_33] : memref<1x8xf32, #tpu.memory_space<vmem>>, vector<1x8xf32>
    %71 = vector.broadcast %70 : vector<1x8xf32> to vector<8x8xf32>
    %72 = arith.addf %69, %71 : vector<8x8xf32>
    %73 = vector.broadcast %67 : vector<8x1xf32> to vector<8x8xf32>
    %74 = arith.addf %73, %72 : vector<8x8xf32>
    %cst_34 = arith.constant dense<0.000000e+00> : vector<8xf32>
    %75 = vector.multi_reduction <add>, %72, %cst_34 [1] : vector<8x8xf32> to vector<8xf32>
    %76 = vector.shape_cast %75 : vector<8xf32> to vector<8x1xf32>
    %cst_35 = arith.constant 8.000000e+00 : f32
    %77 = vector.broadcast %cst_35 : f32 to vector<8x1xf32>
    %78 = arith.divf %76, %77 : vector<8x1xf32>
    %79 = vector.broadcast %78 : vector<8x1xf32> to vector<8x8xf32>
    %80 = arith.subf %74, %79 : vector<8x8xf32>
    %c0_36 = arith.constant 0 : index
    %c0_37 = arith.constant 0 : index
    %81 = vector.load %arg10[%c0_36, %c0_37] : memref<8x8xf32, #tpu.memory_space<vmem>>, vector<8x8xf32>
    tpu.vector_store %arg10[%c0_36, %c0_37], %80 {strides = array<i32>} : memref<8x8xf32, #tpu.memory_space<vmem>>, vector<8x8xf32>,
    return
  }
  func.func @transform_0(%arg0: i32) -> (i32, i32) {
    %c0_i32 = arith.constant 0 : i32
    %c0_i32_0 = arith.constant 0 : i32
    return %arg0, %c0_i32 : i32, i32
  }
  func.func @transform_1(%arg0: i32) -> (i32, i32) {
    %c0_i32 = arith.constant 0 : i32
    %c0_i32_0 = arith.constant 0 : i32
    %c0_i32_1 = arith.constant 0 : i32
    return %c0_i32, %c0_i32_0 : i32, i32
  }
  func.func @transform_2(%arg0: i32) -> (i32, i32) {
    %c0_i32 = arith.constant 0 : i32
    %c0_i32_0 = arith.constant 0 : i32
    %c0_i32_1 = arith.constant 0 : i32
    return %c0_i32, %c0_i32_0 : i32, i32
  }
  func.func @transform_3(%arg0: i32) -> (i32, i32) {
    %c0_i32 = arith.constant 0 : i32
    %c0_i32_0 = arith.constant 0 : i32
    %c0_i32_1 = arith.constant 0 : i32
    return %c0_i32, %c0_i32_0 : i32, i32
  }
  func.func @transform_4(%arg0: i32) -> (i32, i32) {
    %c0_i32 = arith.constant 0 : i32
    %c0_i32_0 = arith.constant 0 : i32
    %c0_i32_1 = arith.constant 0 : i32
    return %c0_i32, %c0_i32_0 : i32, i32
  }
  func.func @transform_5(%arg0: i32) -> (i32, i32) {
    %c0_i32 = arith.constant 0 : i32
    %c0_i32_0 = arith.constant 0 : i32
    %c0_i32_1 = arith.constant 0 : i32
    return %c0_i32, %c0_i32_0 : i32, i32
  }
  func.func @transform_6(%arg0: i32) -> (i32, i32) {
    %c0_i32 = arith.constant 0 : i32
    %c0_i32_0 = arith.constant 0 : i32
    %c0_i32_1 = arith.constant 0 : i32
    return %c0_i32, %c0_i32_0 : i32, i32
  }
  func.func @transform_7(%arg0: i32) -> (i32, i32) {
    %c0_i32 = arith.constant 0 : i32
    %c0_i32_0 = arith.constant 0 : i32
    %c0_i32_1 = arith.constant 0 : i32
    return %c0_i32, %c0_i32_0 : i32, i32
  }
  func.func @transform_8(%arg0: i32) -> (i32, i32) {
    %c0_i32 = arith.constant 0 : i32
    %c0_i32_0 = arith.constant 0 : i32
    %c0_i32_1 = arith.constant 0 : i32
    return %c0_i32, %c0_i32_0 : i32, i32
  }
  func.func @transform_9(%arg0: i32) -> (i32, i32) {
    %c0_i32 = arith.constant 0 : i32
    %c0_i32_0 = arith.constant 0 : i32
    return %arg0, %c0_i32 : i32, i32
  }
}

</mosaic_0001>

<llo_original>
// kernel: tpu_custom_call.1
$region0: #{tpu_custom_call.1}
  #allocation0 [shape = 'u32[]', space=smem, size = 0x4, offset = 0x4, fixed_abs, tag = 'smem constant byte address 0x4 - core index']
  #allocation1 [shape = 'u32[72,128]{1,0:T(1,128)}', space=vmem, size = 0x9000, scoped, tag = 'internal scratch']
  #allocation2 [shape = 'f32[1,1]{1,0:T(1,128)S(1)}', space=vmem, size = 0x200, scoped, tag = 'scoped memory for tpu_custom_call.1']
  %s0 = inlined_call_operand.hbm [shape: f32[24,32], index: 0, kind: input, shape index: {}]
  %s1 = inlined_call_operand.vmem [shape: f32[32,64], index: 1, kind: input, shape index: {}]
  %s2 = inlined_call_operand.vmem [shape: f32[1,64], index: 2, kind: input, shape index: {}]
  %s3 = inlined_call_operand.vmem [shape: f32[1,64], index: 3, kind: input, shape index: {}]
  %s4 = inlined_call_operand.vmem [shape: f32[1,64], index: 4, kind: input, shape index: {}]
  %s5 = inlined_call_operand.vmem [shape: f32[1,32], index: 5, kind: input, shape index: {}]
  %s6 = inlined_call_operand.<no memory space> [shape: f32[1,1], index: 6, kind: input, shape index: {}]
  %s7 = inlined_call_operand.vmem [shape: f32[32,8], index: 7, kind: input, shape index: {}]
  %s8 = inlined_call_operand.vmem [shape: f32[1,8], index: 8, kind: input, shape index: {}]
  %s9 = inlined_call_operand.vmem [shape: f32[24,8], index: 9, kind: output, shape index: {}]
  %s10 = sld [smem:[#allocation0]]
  $region73: #{tpu_custom_call.1} parent=0
    _
  %s12 = ssub.s32 1, %s10
  %s13 = scalar_select 0, %s12, %s10
  %v14 = vstv %s6
  %15 = vst [vmem:[#allocation2] sm:$0x1] %v14
  $region1: #{tpu_custom_call.1} parent=0
    #allocation3 [shape = 'u8[8192]{0}', space=vmem, size = 0x2000, scoped, tag = 'input window, operand 0']
    #allocation4 [shape = 's32[2]{0}', space=sflag, size = 0x8, scoped, tag = 'scoped memory for tpu_custom_call.1']
    %16 = vsyncpa [#allocation4], 0
    %s17 = scalar_lea.sflag [#allocation4], 1
    %18 = vsyncpa %s17, 0
    loop: start=0, step=1, limit=5
    $region2: #{tpu_custom_call.1} parent=1 // loop_pre_header
      _
    $region3: #{tpu_custom_call.1} parent=1 // loop_header
      %s20 = sphi 0, %s24
      %p21 = scmp.ge.s32.totalorder %s20, 5
      %s30 = sphi 0, %s32
      %s33 = sphi 0, %s30
      %s34 = sphi 0, %s33
      %s50 = sphi 0, %s34
      %s54 = sphi 0, %s54
      %s56 = sphi 0, %s54
      %s57 = sphi 0, %s56
      %s71 = sphi 0, %s57
      %s75 = sphi 0, %s75
      %s77 = sphi 0, %s75
      %s78 = sphi 0, %s77
      %s92 = sphi 0, %s78
      %s96 = sphi 0, %s96
      %s98 = sphi 0, %s96
      %s99 = sphi 0, %s98
      %s113 = sphi 0, %s99
      %s117 = sphi 0, %s117
      %s119 = sphi 0, %s117
      %s120 = sphi 0, %s119
      %s134 = sphi 0, %s120
      %s138 = sphi 0, %s138
      %s140 = sphi 0, %s138
      %s141 = sphi 0, %s140
      %s155 = sphi 0, %s141
      %s159 = sphi 0, %s159
      %s161 = sphi 0, %s159
      %s162 = sphi 0, %s161
      %s176 = sphi 0, %s162
      %s180 = sphi 0, %s180
      %s182 = sphi 0, %s180
      %s183 = sphi 0, %s182
      %s197 = sphi 0, %s183
      %s201 = sphi 0, %s201
      %s203 = sphi 0, %s201
      %s204 = sphi 0, %s203
      %s218 = sphi 0, %s204
      %s224 = sphi 0, %s226
      %s227 = sphi 0, %s224
      %s228 = sphi 0, %s227
      %s244 = sphi 0, %s228
    $region4: #{tpu_custom_call.1} parent=1 // loop_header_branch
      %23 = sbr.rel (%p21) target = $region8
    $region5: #{tpu_custom_call.1} parent=1 // loop_body
      %s25 = ssub.s32 %s20, 1
      %s26 = ssub.s32 %s20, 2
      %s27 = sadd.s32 %s20, 1
      %s28 = ssub.s32 %s20, %s27
      %p29 = scmp.eq.s32.totalorder %s28, 0
      %s31 = sadd.s32 %s30, 1
      %s32 = scalar_select %p29, %s30, %s31
      %p35 = pneg %p29
      %p36 = scmp.eq.s32.totalorder %s20, 2
      %p37 = por %p35, %p36
      %p38 = scmp.ne.s32.totalorder %s30, %s33
      %p39 = scmp.eq.s32.totalorder %s20, 0
      %p40 = por %p38, %p39
      %p41 = scmp.ne.s32.totalorder %s30, %s33
      %p42 = scmp.eq.s32.totalorder %s25, 2
      %p43 = por %p41, %p42
      %p44 = scmp.ne.s32.totalorder %s33, %s34
      %p45 = scmp.eq.s32.totalorder %s25, 0
      %p46 = por %p44, %p45
      %p47 = scmp.ne.s32.totalorder %s33, %s34
      %p48 = scmp.eq.s32.totalorder %s26, 2
      %p49 = por %p47, %p48
      %p51 = scmp.ne.s32.totalorder %s34, %s50
      %p52 = scmp.eq.s32.totalorder %s26, 0
      %p53 = por %p51, %p52
      %s55 = sadd.s32 %s54, 1
      %p58 = scmp.eq.s32.totalorder %s20, 2
      %p59 = scmp.ne.s32.totalorder %s54, %s56
      %p60 = scmp.eq.s32.totalorder %s20, 0
      %p61 = por %p59, %p60
      %p62 = scmp.ne.s32.totalorder %s54, %s56
      %p63 = scmp.eq.s32.totalorder %s25, 2
      %p64 = por %p62, %p63
      %p65 = scmp.ne.s32.totalorder %s56, %s57
      %p66 = scmp.eq.s32.totalorder %s25, 0
      %p67 = por %p65, %p66
      %p68 = scmp.ne.s32.totalorder %s56, %s57
      %p69 = scmp.eq.s32.totalorder %s26, 2
      %p70 = por %p68, %p69
      %p72 = scmp.ne.s32.totalorder %s57, %s71
      %p73 = scmp.eq.s32.totalorder %s26, 0
      %p74 = por %p72, %p73
      %s76 = sadd.s32 %s75, 1
      %p79 = scmp.eq.s32.totalorder %s20, 2
      %p80 = scmp.ne.s32.totalorder %s75, %s77
      %p81 = scmp.eq.s32.totalorder %s20, 0
      %p82 = por %p80, %p81
      %p83 = scmp.ne.s32.totalorder %s75, %s77
      %p84 = scmp.eq.s32.totalorder %s25, 2
      %p85 = por %p83, %p84
      %p86 = scmp.ne.s32.totalorder %s77, %s78
      %p87 = scmp.eq.s32.totalorder %s25, 0
      %p88 = por %p86, %p87
      %p89 = scmp.ne.s32.totalorder %s77, %s78
      %p90 = scmp.eq.s32.totalorder %s26, 2
      %p91 = por %p89, %p90
      %p93 = scmp.ne.s32.totalorder %s78, %s92
      %p94 = scmp.eq.s32.totalorder %s26, 0
      %p95 = por %p93, %p94
      %s97 = sadd.s32 %s96, 1
      %p100 = scmp.eq.s32.totalorder %s20, 2
      %p101 = scmp.ne.s32.totalorder %s96, %s98
      %p102 = scmp.eq.s32.totalorder %s20, 0
      %p103 = por %p101, %p102
      %p104 = scmp.ne.s32.totalorder %s96, %s98
      %p105 = scmp.eq.s32.totalorder %s25, 2
      %p106 = por %p104, %p105
      %p107 = scmp.ne.s32.totalorder %s98, %s99
      %p108 = scmp.eq.s32.totalorder %s25, 0
      %p109 = por %p107, %p108
      %p110 = scmp.ne.s32.totalorder %s98, %s99
      %p111 = scmp.eq.s32.totalorder %s26, 2
      %p112 = por %p110, %p111
      %p114 = scmp.ne.s32.totalorder %s99, %s113
      %p115 = scmp.eq.s32.totalorder %s26, 0
      %p116 = por %p114, %p115
      %s118 = sadd.s32 %s117, 1
      %p121 = scmp.eq.s32.totalorder %s20, 2
      %p122 = scmp.ne.s32.totalorder %s117, %s119
      %p123 = scmp.eq.s32.totalorder %s20, 0
      %p124 = por %p122, %p123
      %p125 = scmp.ne.s32.totalorder %s117, %s119
      %p126 = scmp.eq.s32.totalorder %s25, 2
      %p127 = por %p125, %p126
      %p128 = scmp.ne.s32.totalorder %s119, %s120
      %p129 = scmp.eq.s32.totalorder %s25, 0
      %p130 = por %p128, %p129
      %p131 = scmp.ne.s32.totalorder %s119, %s120
      %p132 = scmp.eq.s32.totalorder %s26, 2
      %p133 = por %p131, %p132
      %p135 = scmp.ne.s32.totalorder %s120, %s134
      %p136 = scmp.eq.s32.totalorder %s26, 0
      %p137 = por %p135, %p136
      %s139 = sadd.s32 %s138, 1
      %p142 = scmp.eq.s32.totalorder %s20, 2
      %p143 = scmp.ne.s32.totalorder %s138, %s140
      %p144 = scmp.eq.s32.totalorder %s20, 0
      %p145 = por %p143, %p144
      %p146 = scmp.ne.s32.totalorder %s138, %s140
      %p147 = scmp.eq.s32.totalorder %s25, 2
      %p148 = por %p146, %p147
      %p149 = scmp.ne.s32.totalorder %s140, %s141
      %p150 = scmp.eq.s32.totalorder %s25, 0
      %p151 = por %p149, %p150
      %p152 = scmp.ne.s32.totalorder %s140, %s141
      %p153 = scmp.eq.s32.totalorder %s26, 2
      %p154 = por %p152, %p153
      %p156 = scmp.ne.s32.totalorder %s141, %s155
      %p157 = scmp.eq.s32.totalorder %s26, 0
      %p158 = por %p156, %p157
      %s160 = sadd.s32 %s159, 1
      %p163 = scmp.eq.s32.totalorder %s20, 2
      %p164 = scmp.ne.s32.totalorder %s159, %s161
      %p165 = scmp.eq.s32.totalorder %s20, 0
      %p166 = por %p164, %p165
      %p167 = scmp.ne.s32.totalorder %s159, %s161
      %p168 = scmp.eq.s32.totalorder %s25, 2
      %p169 = por %p167, %p168
      %p170 = scmp.ne.s32.totalorder %s161, %s162
      %p171 = scmp.eq.s32.totalorder %s25, 0
      %p172 = por %p170, %p171
      %p173 = scmp.ne.s32.totalorder %s161, %s162
      %p174 = scmp.eq.s32.totalorder %s26, 2
      %p175 = por %p173, %p174
      %p177 = scmp.ne.s32.totalorder %s162, %s176
      %p178 = scmp.eq.s32.totalorder %s26, 0
      %p179 = por %p177, %p178
      %s181 = sadd.s32 %s180, 1
      %p184 = scmp.eq.s32.totalorder %s20, 2
      %p185 = scmp.ne.s32.totalorder %s180, %s182
      %p186 = scmp.eq.s32.totalorder %s20, 0
      %p187 = por %p185, %p186
      %p188 = scmp.ne.s32.totalorder %s180, %s182
      %p189 = scmp.eq.s32.totalorder %s25, 2
      %p190 = por %p188, %p189
      %p191 = scmp.ne.s32.totalorder %s182, %s183
      %p192 = scmp.eq.s32.totalorder %s25, 0
      %p193 = por %p191, %p192
      %p194 = scmp.ne.s32.totalorder %s182, %s183
      %p195 = scmp.eq.s32.totalorder %s26, 2
      %p196 = por %p194, %p195
      %p198 = scmp.ne.s32.totalorder %s183, %s197
      %p199 = scmp.eq.s32.totalorder %s26, 0
      %p200 = por %p198, %p199
      %s202 = sadd.s32 %s201, 1
      %p205 = scmp.eq.s32.totalorder %s20, 2
      %p206 = scmp.ne.s32.totalorder %s201, %s203
      %p207 = scmp.eq.s32.totalorder %s20, 0
      %p208 = por %p206, %p207
      %p209 = scmp.ne.s32.totalorder %s201, %s203
      %p210 = scmp.eq.s32.totalorder %s25, 2
      %p211 = por %p209, %p210
      %p212 = scmp.ne.s32.totalorder %s203, %s204
      %p213 = scmp.eq.s32.totalorder %s25, 0
      %p214 = por %p212, %p213
      %p215 = scmp.ne.s32.totalorder %s203, %s204
      %p216 = scmp.eq.s32.totalorder %s26, 2
      %p217 = por %p215, %p216
      %p219 = scmp.ne.s32.totalorder %s204, %s218
      %p220 = scmp.eq.s32.totalorder %s26, 0
      %p221 = por %p219, %p220
      %s222 = ssub.s32 %s20, %s27
      %p223 = scmp.eq.s32.totalorder %s222, 0
      %s225 = sadd.s32 %s224, 1
      %s226 = scalar_select %p223, %s224, %s225
      %p229 = pneg %p223
      %p230 = scmp.eq.s32.totalorder %s20, 2
      %p231 = por %p229, %p230
      %p232 = scmp.ne.s32.totalorder %s224, %s227
      %p233 = scmp.eq.s32.totalorder %s20, 0
      %p234 = por %p232, %p233
      %p235 = scmp.ne.s32.totalorder %s224, %s227
      %p236 = scmp.eq.s32.totalorder %s25, 2
      %p237 = por %p235, %p236
      %p238 = scmp.ne.s32.totalorder %s227, %s228
      %p239 = scmp.eq.s32.totalorder %s25, 0
      %p240 = por %p238, %p239
      %p241 = scmp.ne.s32.totalorder %s227, %s228
      %p242 = scmp.eq.s32.totalorder %s26, 2
      %p243 = por %p241, %p242
      %p245 = scmp.ne.s32.totalorder %s228, %s244
      %p246 = scmp.eq.s32.totalorder %s26, 0
      %p247 = por %p245, %p246
      %p248 = scmp.le.s32.totalorder 1, %s20
      %p249 = scmp.lt.s32.totalorder %s20, 4
      %p250 = pnand %p248, %p249
      %p251 = pneg %p250
      // Predicated region
      $region9: #{tpu_custom_call.1} parent=5 // pred_check
        _
      $region10: #{tpu_custom_call.1} parent=5 // pred_check_branch
        %253 = sbr.rel (%p250) target = $region12
      $region11: #{tpu_custom_call.1} parent=5 // pred_region
        %s254 = ssub.s32 %s20, 1
        // Predicated region
        $region13: #{tpu_custom_call.1} parent=11 // pred_check
          %p255 = pneg %p67
        $region14: #{tpu_custom_call.1} parent=11 // pred_check_branch
          %257 = sbr.rel (%p255) target = $region16
        $region15: #{tpu_custom_call.1} parent=11 // pred_region
          _
        $region16: #{tpu_custom_call.1} parent=11 // pred_fallthru
          _
        // Predicated region
        $region17: #{tpu_custom_call.1} parent=11 // pred_check
          %p258 = pneg %p88
        $region18: #{tpu_custom_call.1} parent=11 // pred_check_branch
          %260 = sbr.rel (%p258) target = $region20
        $region19: #{tpu_custom_call.1} parent=11 // pred_region
          _
        $region20: #{tpu_custom_call.1} parent=11 // pred_fallthru
          _
        // Predicated region
        $region21: #{tpu_custom_call.1} parent=11 // pred_check
          %p261 = pneg %p109
        $region22: #{tpu_custom_call.1} parent=11 // pred_check_branch
          %263 = sbr.rel (%p261) target = $region24
        $region23: #{tpu_custom_call.1} parent=11 // pred_region
          _
        $region24: #{tpu_custom_call.1} parent=11 // pred_fallthru
          _
        // Predicated region
        $region25: #{tpu_custom_call.1} parent=11 // pred_check
          %p264 = pneg %p130
        $region26: #{tpu_custom_call.1} parent=11 // pred_check_branch
          %266 = sbr.rel (%p264) target = $region28
        $region27: #{tpu_custom_call.1} parent=11 // pred_region
          _
        $region28: #{tpu_custom_call.1} parent=11 // pred_fallthru
          _
        // Predicated region
        $region29: #{tpu_custom_call.1} parent=11 // pred_check
          %p267 = pneg %p151
        $region30: #{tpu_custom_call.1} parent=11 // pred_check_branch
          %269 = sbr.rel (%p267) target = $region32
        $region31: #{tpu_custom_call.1} parent=11 // pred_region
          _
        $region32: #{tpu_custom_call.1} parent=11 // pred_fallthru
          _
        // Predicated region
        $region33: #{tpu_custom_call.1} parent=11 // pred_check
          %p270 = pneg %p172
        $region34: #{tpu_custom_call.1} parent=11 // pred_check_branch
          %272 = sbr.rel (%p270) target = $region36
        $region35: #{tpu_custom_call.1} parent=11 // pred_region
          _
        $region36: #{tpu_custom_call.1} parent=11 // pred_fallthru
          _
        // Predicated region
        $region37: #{tpu_custom_call.1} parent=11 // pred_check
          %p273 = pneg %p193
        $region38: #{tpu_custom_call.1} parent=11 // pred_check_branch
          %275 = sbr.rel (%p273) target = $region40
        $region39: #{tpu_custom_call.1} parent=11 // pred_region
          _
        $region40: #{tpu_custom_call.1} parent=11 // pred_fallthru
          _
        // Predicated region
        $region41: #{tpu_custom_call.1} parent=11 // pred_check
          %p276 = pneg %p214
        $region42: #{tpu_custom_call.1} parent=11 // pred_check_branch
          %278 = sbr.rel (%p276) target = $region44
        $region43: #{tpu_custom_call.1} parent=11 // pred_region
          _
        $region44: #{tpu_custom_call.1} parent=11 // pred_fallthru
          _
      $region12: #{tpu_custom_call.1} parent=5 // pred_fallthru
        _
      %p279 = scmp.lt.s32.totalorder %s20, 3
      // Predicated region
      $region45: #{tpu_custom_call.1} parent=5 // pred_check
        %p280 = pneg %p279
      $region46: #{tpu_custom_call.1} parent=5 // pred_check_branch
        %282 = sbr.rel (%p280) target = $region48
      $region47: #{tpu_custom_call.1} parent=5 // pred_region
        // Predicated region
        $region49: #{tpu_custom_call.1} parent=47 // pred_check
          %p283 = pneg %p40
        $region50: #{tpu_custom_call.1} parent=47 // pred_check_branch
          %285 = sbr.rel (%p283) target = $region52
        $region51: #{tpu_custom_call.1} parent=47 // pred_region
          %s286 = sand.u32 %s30, 1
          %s287 = scalar_lea.sflag [#allocation4], %s286
          %s288 = sand.u32 %s30, 1
          %s289 = smul.addr %s288, 8
          %s290 = scalar_lea.vmem [#allocation3], %s289
          %292 = vsyncadd %s287, 0
          %s293 = smul.addr %s20, 8
          %s294 = scalar_lea.hbm %s0, %s293
          %s296 = sshll.u32 %s294, 4
          %s297 = int_to_ptr.hbm [resolvable:$true] %s296
          %s298 = sshll.u32 %s290, 4
          %s299 = int_to_ptr.vmem [resolvable:$true] %s298
          %301 = dma.hbm_to_vmem [thread:$0]  %s297, 128, %s299, %s287
        $region52: #{tpu_custom_call.1} parent=47 // pred_fallthru
          _
      $region48: #{tpu_custom_call.1} parent=5 // pred_fallthru
        _
      %p302 = scmp.le.s32.totalorder 1, %s20
      %p303 = scmp.lt.s32.totalorder %s20, 4
      %p304 = pnand %p302, %p303
      %p305 = pneg %p304
      // Predicated region
      $region53: #{tpu_custom_call.1} parent=5 // pred_check
        _
      $region54: #{tpu_custom_call.1} parent=5 // pred_check_branch
        %307 = sbr.rel (%p304) target = $region56
      $region55: #{tpu_custom_call.1} parent=5 // pred_region
        %s308 = ssub.s32 %s20, 1
        %s309 = sand.u32 %s33, 1
        %s310 = scalar_lea.sflag [#allocation4], %s309
        %s311 = sand.u32 %s33, 1
        %s312 = smul.addr %s311, 8
        %s313 = scalar_lea.vmem [#allocation3], %s312
        // Predicated region
        $region57: #{tpu_custom_call.1} parent=55 // pred_check
          %p314 = pneg %p46
        $region58: #{tpu_custom_call.1} parent=55 // pred_check_branch
          %316 = sbr.rel (%p314) target = $region60
        $region59: #{tpu_custom_call.1} parent=55 // pred_region
          %318 = dma.done %s310, 128
        $region60: #{tpu_custom_call.1} parent=55 // pred_fallthru
          _
        %s319 = sand.u32 %s33, 1
        %s320 = scalar_lea.sflag [#allocation4], %s319
        %s321 = sand.u32 %s33, 1
        %s322 = smul.addr %s321, 8
        %s323 = scalar_lea.vmem [#allocation3], %s322
        %p324 = pneg %p46
        %p325 = pneg %p43
        %p326 = pneg %p67
        %p327 = pneg %p64
        %p328 = pneg %p88
        %p329 = pneg %p85
        %p330 = pneg %p109
        %p331 = pneg %p106
        %p332 = pneg %p130
        %p333 = pneg %p127
        %p334 = pneg %p151
        %p335 = pneg %p148
        %p336 = pneg %p172
        %p337 = pneg %p169
        %p338 = pneg %p193
        %p339 = pneg %p190
        %p340 = pneg %p214
        %p341 = pneg %p211
        %p342 = pneg %p240
        %p343 = pneg %p237
        %p344 = scmp.lt.s32.totalorder %s25, 2
        %s345 = scalar_select %p344, %s25, 2
        %s346 = smul.addr %s345, 8
        %s347 = scalar_lea.vmem %s9, %s346
        %p348 = scmp.lt.s32.totalorder %s25, 2
        %s349 = scalar_select %p348, %s25, 2
        %s350 = smul.addr %s349, 8
        %s351 = scalar_lea.vmem %s9, %s350
        %v352 = vld [vmem:[%s313] sm:$0xff]
        %v353 = vld [vmem:[%s1] sm:$0xff]
        %v354 = vld [vmem:[%s1 + $0x8] sm:$0xff]
        %v355 = vld [vmem:[%s1 + $0x10] sm:$0xff]
        %v356 = vld [vmem:[%s1 + $0x18] sm:$0xff]
        %v357 = vld [vmem:[%s2] sm:$0x1]
        %v359 = vperm.slane %v357, 0
        %vm361 = vcmask 261120
        %v363 = vsel %vm361, %v352, 0
        %365 = vmatpush.msra.mxu0 0.0
        %366 = vmatpush.msra.mxu0 0.0
        %367 = vmatpush.msra.mxu0 0.0
        %368 = vmatpush.msra.mxu0 0.0
        %369 = vmatpush.msra.mxu0 0.0
        %370 = vmatpush.msra.mxu0 0.0
        %371 = vmatpush.msra.mxu0 0.0
        %372 = vmatpush.msra.mxu0 0.0
        %373 = vmatpush.msra.mxu0 0.0
        %374 = vmatpush.msra.mxu0 0.0
        %375 = vmatpush.msra.mxu0 0.0
        %376 = vmatpush.msra.mxu0 0.0
        %377 = vmatpush.msra.mxu0 %v356
        %378 = vmatpush.msra.mxu0 %v355
        %379 = vmatpush.msra.mxu0 %v354
        %380 = vmatpush.msra.mxu0 %v353
        %381 = vmatmul.f32.gmra.mxu0 %v363
        %v382 = vpop.f32.mrf.mxu0
        %v383 = vadd.f32 %v359, %v382
        %384 = vdwg.mxu0
        %v385 = vld [vmem:[%s3] sm:$0x1]
        %v386 = vld [vmem:[%s4] sm:$0x1]
        %v387 = vsel %vm361, %v383, 0.0
        %388 = vadd.xlane.f32.xlu0 %v387
        %v389 = vpop.xlane.xlu0 %388
        %v390 = vrcp.pop 32.0
        %v391 = vmul.f32 32.0, %v390
        %v392 = vsub.f32 1.0, %v391
        %v393 = vmul.f32 %v390, %v392
        %v394 = vadd.f32 %v390, %v393
        %vm395 = vweird.f32 %v390
        %v396 = vsel %vm395, %v390, %v394
        %v397 = vmul.f32 %v389, %v396
        %v398 = vsub.f32 %v383, %v397
        %v399 = vmul.f32 %v398, %v398
        %v400 = vsel %vm361, %v399, 0.0
        %401 = vadd.xlane.f32.xlu0 %v400
        %v402 = vpop.xlane.xlu0 %401
        %v403 = vmul.f32 %v402, %v396
        %v404 = vadd.f32 %v403, 1e-05
        %v405 = vrsqrt.pop %v404
        %v406 = vmul.f32 %v405, %v404
        %v407 = vmul.f32 %v406, %v405
        %v408 = vmul.f32 0.5, %v407
        %v409 = vsub.f32 1.5, %v408
        %v410 = vmul.f32 %v405, %v409
        %vm411 = vweird.f32 %v404
        %vm412 = vweird.f32 %v405
        %vm413 = vmor %vm411, %vm412
        %v414 = vsel %vm413, %v405, %v410
        %v415 = vmul.f32 %v398, %v414
        %v417 = vperm.slane %v385, 0
        %v419 = vmul.f32 %v415, %v417
        %v421 = vperm.slane %v386, 0
        %v423 = vadd.f32 %v419, %v421
        %v424 = vmax.f32 %v423, 0.0
        %426 = vrot.lane.b32.xlu0 %v383, 96
        %v427 = vpop.permute.xlu0 %426
        %v429 = vsel %vm361, %v427, 0.0
        %430 = vadd.xlane.f32.xlu0 %v429
        %v431 = vpop.xlane.xlu0 %430
        %v432 = vmul.f32 %v431, %v396
        %v433 = vsub.f32 %v383, %v432
        %v434 = vmul.f32 %v433, %v433
        %436 = vrot.lane.b32.xlu0 %v434, 96
        %v437 = vpop.permute.xlu0 %436
        %v439 = vsel %vm361, %v437, 0.0
        %440 = vadd.xlane.f32.xlu0 %v439
        %v441 = vpop.xlane.xlu0 %440
        %v442 = vmul.f32 %v441, %v396
        %v443 = vadd.f32 %v442, 1e-05
        %v444 = vrsqrt.pop %v443
        %v445 = vmul.f32 %v444, %v443
        %v446 = vmul.f32 %v445, %v444
        %v447 = vmul.f32 0.5, %v446
        %v448 = vsub.f32 1.5, %v447
        %v449 = vmul.f32 %v444, %v448
        %vm450 = vweird.f32 %v443
        %vm451 = vweird.f32 %v444
        %vm452 = vmor %vm450, %vm451
        %v453 = vsel %vm452, %v444, %v449
        %v454 = vmul.f32 %v433, %v453
        %v455 = vmul.f32 %v454, %v417
        %v456 = vadd.f32 %v455, %v421
        %v457 = vmax.f32 %v456, 0.0
        %v458 = vld [vmem:[%s5] sm:$0x1]
        %v460 = vperm.slane %v458, 0
        %v462 = vmul.f32 %v424, %v460
        %v463 = vsel %vm361, %v462, 0.0
        %464 = vadd.xlane.f32.xlu0 %v463
        %v465 = vpop.xlane.xlu0 %464
        %v466 = vld [vmem:[#allocation2] sm:$0x1]
        %v468 = vperm.slane %v466, 0
        %v470 = vadd.f32 %v465, %v468
        %v471 = vld [vmem:[%s7] sm:$0xff]
        %v472 = vld [vmem:[%s7 + $0x8] sm:$0xff]
        %v473 = vld [vmem:[%s7 + $0x10] sm:$0xff]
        %v474 = vld [vmem:[%s7 + $0x18] sm:$0xff]
        %v475 = vld [vmem:[%s8] sm:$0x1]
        %v477 = vperm.slane %v475, 0
        %480 = vrot.lane.b32.xlu0 %v457, 96
        %v481 = vpop.permute.xlu0 %480
        %v482 = vsel %vm361, %v481, 0
        %484 = vmatpush.msra.mxu0 0.0
        %485 = vmatpush.msra.mxu0 0.0
        %486 = vmatpush.msra.mxu0 0.0
        %487 = vmatpush.msra.mxu0 0.0
        %488 = vmatpush.msra.mxu0 0.0
        %489 = vmatpush.msra.mxu0 0.0
        %490 = vmatpush.msra.mxu0 0.0
        %491 = vmatpush.msra.mxu0 0.0
        %492 = vmatpush.msra.mxu0 0.0
        %493 = vmatpush.msra.mxu0 0.0
        %494 = vmatpush.msra.mxu0 0.0
        %495 = vmatpush.msra.mxu0 0.0
        %496 = vmatpush.msra.mxu0 %v474
        %497 = vmatpush.msra.mxu0 %v473
        %498 = vmatpush.msra.mxu0 %v472
        %499 = vmatpush.msra.mxu0 %v471
        %500 = vmatmul.f32.gmra.mxu0 %v482
        %v501 = vpop.f32.mrf.mxu0
        %v502 = vadd.f32 %v477, %v501
        %503 = vdwg.mxu0
        %505 = vset.pattern.permute.xlu0 0
        %506 = vperm.xlu0 %505, %v470
        %v507 = vpop.permute.xlu0 %506
        %v509 = vadd.f32 %v507, %v502
        %vm510 = vcmask 64512
        %v511 = vsel %vm510, %v502, 0.0
        %512 = vadd.xlane.f32.xlu0 %v511
        %v513 = vpop.xlane.xlu0 %512
        %v514 = vrcp.pop 8.0
        %v515 = vmul.f32 8.0, %v514
        %v516 = vsub.f32 1.0, %v515
        %v517 = vmul.f32 %v514, %v516
        %v518 = vadd.f32 %v514, %v517
        %vm519 = vweird.f32 %v514
        %v520 = vsel %vm519, %v514, %v518
        %v521 = vmul.f32 %v513, %v520
        %v522 = vsub.f32 %v509, %v521
        %523 = vst.msk [vmem:[%s351] sm:$0xff] %vm510, %v522
        %p524 = scmp.lt.s32.totalorder %s25, 2
        %s525 = scalar_select %p524, %s25, 2
        %s526 = smul.addr %s525, 8
        %s527 = scalar_lea.vmem %s9, %s526
        // Predicated region
        $region61: #{tpu_custom_call.1} parent=55 // pred_check
          %p528 = pneg %p237
        $region62: #{tpu_custom_call.1} parent=55 // pred_check_branch
          %530 = sbr.rel (%p528) target = $region64
        $region63: #{tpu_custom_call.1} parent=55 // pred_region
          _
        $region64: #{tpu_custom_call.1} parent=55 // pred_fallthru
          _
      $region56: #{tpu_custom_call.1} parent=5 // pred_fallthru
        _
      %p531 = scmp.le.s32.totalorder 2, %s20
      // Predicated region
      $region65: #{tpu_custom_call.1} parent=5 // pred_check
        %p532 = pneg %p531
      $region66: #{tpu_custom_call.1} parent=5 // pred_check_branch
        %534 = sbr.rel (%p532) target = $region68
      $region67: #{tpu_custom_call.1} parent=5 // pred_region
        %s535 = ssub.s32 %s20, 2
        // Predicated region
        $region69: #{tpu_custom_call.1} parent=67 // pred_check
          %p536 = pneg %p243
        $region70: #{tpu_custom_call.1} parent=67 // pred_check_branch
          %538 = sbr.rel (%p536) target = $region72
        $region71: #{tpu_custom_call.1} parent=67 // pred_region
          %p539 = scmp.lt.s32.totalorder %s26, 2
          %s540 = scalar_select %p539, %s26, 2
          %s541 = smul.addr %s540, 8
          %s542 = scalar_lea.vmem %s9, %s541
        $region72: #{tpu_custom_call.1} parent=67 // pred_fallthru
          _
      $region68: #{tpu_custom_call.1} parent=5 // pred_fallthru
        _
    $region6: #{tpu_custom_call.1} parent=1 // loop_footer
      %s24 = sadd.s32 1, %s20
    $region7: #{tpu_custom_call.1} parent=1 // loop_footer_branch
      %19 = sbr.rel target = $region3
    $region8: #{tpu_custom_call.1} parent=1 // loop_exit
      _
    %543 = vsyncpa [#allocation4], 1
    %s544 = scalar_lea.sflag [#allocation4], 1
    %545 = vsyncpa %s544, 1

</llo_original>
